<compile_context>
chip_gen: v7x
topology: tpu7x:2x2x1
jax: 0.10.0
libtpu: 0.0.40
codegen_flags: <defaults>
</compile_context>

<pallas_src>
import functools

import jax
import jax.numpy as jnp
from jax.experimental import pallas as pl
from jax.experimental.pallas import tpu as pltpu


def bert_output_kernel(h_ref, w_ref, b_ref, res_ref, g_ref, beta_ref, o_ref, *, eps):
    # MXU hot path: (tm, I) @ (I, H) -> (tm, H), bf16 inputs, f32 accumulate.
    y = jnp.dot(h_ref[...], w_ref[...], preferred_element_type=jnp.float32)
    y = y + b_ref[...].astype(jnp.float32)        # bias (1, H) broadcasts over rows
    # TODO(synk): StableDropout in training mode (prob > 0) not implemented; eval-mode identity.
    y = y + res_ref[...].astype(jnp.float32)      # residual add

    # LayerNorm over the hidden (last) dim -- all in f32.
    mean = jnp.mean(y, axis=-1, keepdims=True)
    centered = y - mean
    var = jnp.mean(centered * centered, axis=-1, keepdims=True)
    inv = jax.lax.rsqrt(var + eps)
    out = centered * inv * g_ref[...].astype(jnp.float32) + beta_ref[...].astype(jnp.float32)
    o_ref[...] = out.astype(o_ref.dtype)


def _round_up(x, m):
    return (x + m - 1) // m * m


def bert_output(hidden_states, input_states, weight, bias, gamma, beta,
                *, eps=1e-7, tm=512, matmul_dtype=jnp.bfloat16,
                vmem_limit_bytes=48 * 1024 * 1024):
    """hidden_states: (B, S, I); input_states: (B, S, H); weight: (I, H) = dense.weight.T."""
    B, S, I = hidden_states.shape
    H = weight.shape[1]
    N = B * S

    out_dtype = input_states.dtype

    h2 = hidden_states.reshape(N, I).astype(matmul_dtype)
    w2 = weight.astype(matmul_dtype)
    r2 = input_states.reshape(N, H)
    b2 = bias.reshape(1, H)
    g2 = gamma.reshape(1, H)
    be2 = beta.reshape(1, H)

    # Row tile: as large as requested, but no larger than (sublane-rounded) N.
    tm_eff = min(tm, _round_up(N, 8))
    n_pad = _round_up(N, tm_eff)
    if n_pad != N:
        h2 = jnp.pad(h2, ((0, n_pad - N), (0, 0)))
        r2 = jnp.pad(r2, ((0, n_pad - N), (0, 0)))

    kernel = functools.partial(bert_output_kernel, eps=eps)

    in_specs = [
        pl.BlockSpec((tm_eff, I), lambda i: (i, 0)),   # hidden_states tile (bf16)
        pl.BlockSpec((I, H), lambda i: (0, 0)),        # weight (whole, bf16) -- constant block
        pl.BlockSpec((1, H), lambda i: (0, 0)),        # bias
        pl.BlockSpec((tm_eff, H), lambda i: (i, 0)),   # residual tile
        pl.BlockSpec((1, H), lambda i: (0, 0)),        # LayerNorm gamma
        pl.BlockSpec((1, H), lambda i: (0, 0)),        # LayerNorm beta
    ]

    out = pl.pallas_call(
        kernel,
        out_shape=jax.ShapeDtypeStruct((n_pad, H), out_dtype),
        grid_spec=pltpu.PrefetchScalarGridSpec(
            num_scalar_prefetch=0,
            grid=(n_pad // tm_eff,),
            in_specs=in_specs,
            out_specs=pl.BlockSpec((tm_eff, H), lambda i: (i, 0)),
        ),
        compiler_params=pltpu.CompilerParams(
            dimension_semantics=("parallel",),   # megacore split on v7x
            vmem_limit_bytes=vmem_limit_bytes),
    )(h2, w2, b2, r2, g2, be2)

    return out[:N].reshape(B, S, H)


def bert_output_ref(hidden_states, input_states, weight, bias, gamma, beta,
                    eps=1e-7, matmul_dtype=jnp.float32):
    y = jnp.einsum("bsi,ih->bsh",
                   hidden_states.astype(matmul_dtype),
                   weight.astype(matmul_dtype),
                   preferred_element_type=jnp.float32) + bias
    y = y + input_states
    mean = jnp.mean(y, axis=-1, keepdims=True)
    var = jnp.mean((y - mean) ** 2, axis=-1, keepdims=True)
    return (y - mean) * jax.lax.rsqrt(var + eps) * gamma + beta


if __name__ == "__main__":
    # Small config: intermediate_size=512, hidden_size=128, layer_norm_eps=1e-7
    B, S, I, H = 2, 8, 512, 128
    eps = 1e-7

    key = jax.random.PRNGKey(0)
    k1, k2, k3, k4, k5 = jax.random.split(key, 5)

    hidden_states = jax.random.normal(k1, (B, S, I), dtype=jnp.float32)
    input_states = jax.random.normal(k2, (B, S, H), dtype=jnp.float32)
    # dense: nn.Linear(I, H) -> weight (H, I); store transposed (I, H) for the kernel.
    weight = jax.random.normal(k3, (I, H), dtype=jnp.float32) * 0.02
    bias = jax.random.normal(k4, (H,), dtype=jnp.float32) * 0.02
    gamma = jnp.ones((H,), dtype=jnp.float32) + 0.1 * jax.random.normal(k5, (H,), dtype=jnp.float32)
    beta = jnp.zeros((H,), dtype=jnp.float32)

    # 1) Exact-semantics check: f32 matmul path vs. f32 reference.
    out_f32 = bert_output(hidden_states, input_states, weight, bias, gamma, beta,
                          eps=eps, matmul_dtype=jnp.float32)
    out_f32 = jax.block_until_ready(out_f32)
    ref_f32 = bert_output_ref(hidden_states, input_states, weight, bias, gamma, beta,
                              eps=eps, matmul_dtype=jnp.float32)
    assert out_f32.shape == (B, S, H)
    assert jnp.allclose(out_f32, ref_f32, atol=1e-3, rtol=1e-3), "f32 path mismatch vs reference"

    # 2) Default fast path: bf16 matmul (f32 accumulation) vs. matching reference.
    out_bf16 = bert_output(hidden_states, input_states, weight, bias, gamma, beta, eps=eps)
    out_bf16 = jax.block_until_ready(out_bf16)
    ref_bf16 = bert_output_ref(hidden_states, input_states, weight, bias, gamma, beta,
                               eps=eps, matmul_dtype=jnp.bfloat16)
    assert out_bf16.shape == (B, S, H)
    assert jnp.allclose(out_bf16, ref_bf16, atol=1e-2, rtol=1e-2), "bf16 path mismatch vs reference"

    print("KERNEL_OK")
</pallas_src>

<mosaic_0001>
module attributes {stable_mosaic.version = 11 : i64} {
  func.func @bert_output_kernel(%arg0: i32, %arg1: memref<16x512xf32, #tpu.memory_space<vmem>>, %arg2: memref<512x128xf32, #tpu.memory_space<vmem>>, %arg3: memref<1x128xf32, #tpu.memory_space<vmem>>, %arg4: memref<16x128xf32, #tpu.memory_space<vmem>>, %arg5: memref<1x128xf32, #tpu.memory_space<vmem>>, %arg6: memref<1x128xf32, #tpu.memory_space<vmem>>, %arg7: memref<16x128xf32, #tpu.memory_space<vmem>>) attributes {dimension_semantics = [#tpu.dimension_semantics<parallel>], iteration_bounds = array<i64: 1>, scalar_prefetch = 0 : i64, scratch_operands = 0 : i64, tpu.core_type = #tpu.core_type<tc>, window_params = [{transform_indices = @transform_0, window_bounds = array<i64: 16, 512>}, {pipeline_mode = #tpu.pipeline_mode<synchronous>, transform_indices = @transform_1, window_bounds = array<i64: 512, 128>}, {pipeline_mode = #tpu.pipeline_mode<synchronous>, transform_indices = @transform_2, window_bounds = array<i64: 1, 128>}, {transform_indices = @transform_3, window_bounds = array<i64: 16, 128>}, {pipeline_mode = #tpu.pipeline_mode<synchronous>, transform_indices = @transform_4, window_bounds = array<i64: 1, 128>}, {pipeline_mode = #tpu.pipeline_mode<synchronous>, transform_indices = @transform_5, window_bounds = array<i64: 1, 128>}, {transform_indices = @transform_6, window_bounds = array<i64: 16, 128>}]} {
    %c0 = arith.constant 0 : index
    %c0_0 = arith.constant 0 : index
    %0 = vector.load %arg1[%c0, %c0_0] : memref<16x512xf32, #tpu.memory_space<vmem>>, vector<16x512xf32>
    %c0_1 = arith.constant 0 : index
    %c0_2 = arith.constant 0 : index
    %1 = vector.load %arg2[%c0_1, %c0_2] : memref<512x128xf32, #tpu.memory_space<vmem>>, vector<512x128xf32>
    %cst = arith.constant dense<0.000000e+00> : vector<16x128xf32>
    %2 = tpu.matmul %0, %1, %cst {dimension_numbers = #tpu.dot_dimension_numbers<[1], [0], [0], [1], [0, 0, 1, 1], [], []>} : vector<16x512xf32>, vector<512x128xf32>, vector<16x128xf32> -> vector<16x128xf32>
    %c0_3 = arith.constant 0 : index
    %c0_4 = arith.constant 0 : index
    %3 = vector.load %arg3[%c0_3, %c0_4] : memref<1x128xf32, #tpu.memory_space<vmem>>, vector<1x128xf32>
    %4 = vector.broadcast %3 : vector<1x128xf32> to vector<16x128xf32>
    %5 = arith.addf %2, %4 : vector<16x128xf32>
    %c0_5 = arith.constant 0 : index
    %c0_6 = arith.constant 0 : index
    %6 = vector.load %arg4[%c0_5, %c0_6] : memref<16x128xf32, #tpu.memory_space<vmem>>, vector<16x128xf32>
    %7 = arith.addf %5, %6 : vector<16x128xf32>
    %cst_7 = arith.constant dense<0.000000e+00> : vector<16xf32>
    %8 = vector.multi_reduction <add>, %7, %cst_7 [1] : vector<16x128xf32> to vector<16xf32>
    %9 = vector.shape_cast %8 : vector<16xf32> to vector<16x1xf32>
    %cst_8 = arith.constant 1.280000e+02 : f32
    %10 = vector.broadcast %cst_8 : f32 to vector<16x1xf32>
    %11 = arith.divf %9, %10 : vector<16x1xf32>
    %12 = vector.broadcast %11 : vector<16x1xf32> to vector<16x128xf32>
    %13 = arith.subf %7, %12 : vector<16x128xf32>
    %14 = arith.mulf %13, %13 : vector<16x128xf32>
    %cst_9 = arith.constant dense<0.000000e+00> : vector<16xf32>
    %15 = vector.multi_reduction <add>, %14, %cst_9 [1] : vector<16x128xf32> to vector<16xf32>
    %16 = vector.shape_cast %15 : vector<16xf32> to vector<16x1xf32>
    %cst_10 = arith.constant 1.280000e+02 : f32
    %17 = vector.broadcast %cst_10 : f32 to vector<16x1xf32>
    %18 = arith.divf %16, %17 : vector<16x1xf32>
    %cst_11 = arith.constant 1.000000e-07 : f32
    %19 = vector.broadcast %cst_11 : f32 to vector<16x1xf32>
    %20 = arith.addf %18, %19 : vector<16x1xf32>
    %21 = math.rsqrt %20 : vector<16x1xf32>
    %22 = vector.broadcast %21 : vector<16x1xf32> to vector<16x128xf32>
    %23 = arith.mulf %13, %22 : vector<16x128xf32>
    %c0_12 = arith.constant 0 : index
    %c0_13 = arith.constant 0 : index
    %24 = vector.load %arg5[%c0_12, %c0_13] : memref<1x128xf32, #tpu.memory_space<vmem>>, vector<1x128xf32>
    %25 = vector.broadcast %24 : vector<1x128xf32> to vector<16x128xf32>
    %26 = arith.mulf %23, %25 : vector<16x128xf32>
    %c0_14 = arith.constant 0 : index
    %c0_15 = arith.constant 0 : index
    %27 = vector.load %arg6[%c0_14, %c0_15] : memref<1x128xf32, #tpu.memory_space<vmem>>, vector<1x128xf32>
    %28 = vector.broadcast %27 : vector<1x128xf32> to vector<16x128xf32>
    %29 = arith.addf %26, %28 : vector<16x128xf32>
    %c0_16 = arith.constant 0 : index
    %c0_17 = arith.constant 0 : index
    %30 = vector.load %arg7[%c0_16, %c0_17] : memref<16x128xf32, #tpu.memory_space<vmem>>, vector<16x128xf32>
    tpu.vector_store %arg7[%c0_16, %c0_17], %29 {strides = array<i32>} : memref<16x128xf32, #tpu.memory_space<vmem>>, vector<16x128xf32>,
    return
  }
  func.func @transform_0(%arg0: i32) -> (i32, i32) {
    %c0_i32 = arith.constant 0 : i32
    %c0_i32_0 = arith.constant 0 : i32
    return %arg0, %c0_i32 : i32, i32
  }
  func.func @transform_1(%arg0: i32) -> (i32, i32) {
    %c0_i32 = arith.constant 0 : i32
    %c0_i32_0 = arith.constant 0 : i32
    %c0_i32_1 = arith.constant 0 : i32
    return %c0_i32, %c0_i32_0 : i32, i32
  }
  func.func @transform_2(%arg0: i32) -> (i32, i32) {
    %c0_i32 = arith.constant 0 : i32
    %c0_i32_0 = arith.constant 0 : i32
    %c0_i32_1 = arith.constant 0 : i32
    return %c0_i32, %c0_i32_0 : i32, i32
  }
  func.func @transform_3(%arg0: i32) -> (i32, i32) {
    %c0_i32 = arith.constant 0 : i32
    %c0_i32_0 = arith.constant 0 : i32
    return %arg0, %c0_i32 : i32, i32
  }
  func.func @transform_4(%arg0: i32) -> (i32, i32) {
    %c0_i32 = arith.constant 0 : i32
    %c0_i32_0 = arith.constant 0 : i32
    %c0_i32_1 = arith.constant 0 : i32
    return %c0_i32, %c0_i32_0 : i32, i32
  }
  func.func @transform_5(%arg0: i32) -> (i32, i32) {
    %c0_i32 = arith.constant 0 : i32
    %c0_i32_0 = arith.constant 0 : i32
    %c0_i32_1 = arith.constant 0 : i32
    return %c0_i32, %c0_i32_0 : i32, i32
  }
  func.func @transform_6(%arg0: i32) -> (i32, i32) {
    %c0_i32 = arith.constant 0 : i32
    %c0_i32_0 = arith.constant 0 : i32
    return %arg0, %c0_i32 : i32, i32
  }
}

</mosaic_0001>

<llo_original>
// kernel: tpu_custom_call.1
$region0: #{tpu_custom_call.1}
  #allocation0 [shape = 'u32[]', space=smem, size = 0x4, offset = 0x4, fixed_abs, tag = 'smem constant byte address 0x4 - core index']
  #allocation1 [shape = 'u32[144,128]{1,0:T(1,128)}', space=vmem, size = 0x12000, scoped, tag = 'internal scratch']
  %s0 = inlined_call_operand.hbm [shape: f32[16,512], index: 0, kind: input, shape index: {}]
  %s1 = inlined_call_operand.hbm [shape: f32[512,128], index: 1, kind: input, shape index: {}]
  %s2 = inlined_call_operand.vmem [shape: f32[1,128], index: 2, kind: input, shape index: {}]
  %s3 = inlined_call_operand.hbm [shape: f32[16,128], index: 3, kind: input, shape index: {}]
  %s4 = inlined_call_operand.vmem [shape: f32[1,128], index: 4, kind: input, shape index: {}]
  %s5 = inlined_call_operand.vmem [shape: f32[1,128], index: 5, kind: input, shape index: {}]
  %s6 = inlined_call_operand.hbm [shape: f32[16,128], index: 6, kind: output, shape index: {}]
  %s7 = sld [smem:[#allocation0]]
  $region46: #{tpu_custom_call.1} parent=0
    _
  %s9 = ssub.s32 1, %s7
  %s10 = scalar_select 0, %s9, %s7
  $region1: #{tpu_custom_call.1} parent=0
    #allocation2 [shape = 'u8[32768]{0}', space=vmem, size = 0x8000, scoped, tag = 'input window, operand 0, single buffered']
    #allocation3 [shape = 's32[1]{0}', space=sflag, size = 0x4, scoped, tag = 'scoped memory for tpu_custom_call.1']
    #allocation4 [shape = 's32[1]{0}', space=sflag, size = 0x4, scoped, tag = 'scoped memory for tpu_custom_call.1']
    #allocation5 [shape = 'u8[262144]{0}', space=vmem, size = 0x40000, scoped, tag = 'input window, operand 1, single buffered']
    #allocation6 [shape = 's32[1]{0}', space=sflag, size = 0x4, scoped, tag = 'scoped memory for tpu_custom_call.1']
    #allocation7 [shape = 'u8[8192]{0}', space=vmem, size = 0x2000, scoped, tag = 'input window, operand 3, single buffered']
    #allocation8 [shape = 'u8[8192]{0}', space=vmem, size = 0x2000, scoped, tag = 'output window, operand 0, single buffered']
    %11 = vsyncpa [#allocation3], 0
    %12 = vsyncpa [#allocation6], 0
    %13 = vsyncpa [#allocation4], 0
    // Predicated region
    $region2: #{tpu_custom_call.1} parent=1 // pred_check
      _
    $region3: #{tpu_custom_call.1} parent=1 // pred_check_branch
      %15 = sbr.rel (0) target = $region5
    $region4: #{tpu_custom_call.1} parent=1 // pred_region
      %s17 = ssub.s32 1024, 1024
      %18 = vsyncadd [#allocation3], %s17
      %s19 = sshll.u32 [#allocation2], 4
      %s20 = int_to_ptr.vmem [resolvable:$true] %s19
      %25 = dma.hbm_to_vmem [thread:$0]  %s0, 1024, %s20, [#allocation3], 512, 512, 32
    $region5: #{tpu_custom_call.1} parent=1 // pred_fallthru
      _
    // Predicated region
    $region6: #{tpu_custom_call.1} parent=1 // pred_check
      _
    $region7: #{tpu_custom_call.1} parent=1 // pred_check_branch
      %27 = sbr.rel (0) target = $region9
    $region8: #{tpu_custom_call.1} parent=1 // pred_region
      %s29 = ssub.s32 8192, 8192
      %30 = vsyncadd [#allocation6], %s29
      %s31 = sshll.u32 [#allocation5], 4
      %s32 = int_to_ptr.vmem [resolvable:$true] %s31
      %37 = dma.hbm_to_vmem [thread:$0]  %s1, 8192, %s32, [#allocation6], 128, 128, 8
    $region9: #{tpu_custom_call.1} parent=1 // pred_fallthru
      _
    // Predicated region
    $region10: #{tpu_custom_call.1} parent=1 // pred_check
      _
    $region11: #{tpu_custom_call.1} parent=1 // pred_check_branch
      %39 = sbr.rel (0) target = $region13
    $region12: #{tpu_custom_call.1} parent=1 // pred_region
      _
    $region13: #{tpu_custom_call.1} parent=1 // pred_fallthru
      _
    // Predicated region
    $region14: #{tpu_custom_call.1} parent=1 // pred_check
      _
    $region15: #{tpu_custom_call.1} parent=1 // pred_check_branch
      %41 = sbr.rel (0) target = $region17
    $region16: #{tpu_custom_call.1} parent=1 // pred_region
      %s43 = ssub.s32 256, 256
      %44 = vsyncadd [#allocation6], %s43
      %s45 = sshll.u32 [#allocation7], 4
      %s46 = int_to_ptr.vmem [resolvable:$true] %s45
      %51 = dma.hbm_to_vmem [thread:$0]  %s3, 256, %s46, [#allocation6], 128, 128, 8
    $region17: #{tpu_custom_call.1} parent=1 // pred_fallthru
      _
    // Predicated region
    $region18: #{tpu_custom_call.1} parent=1 // pred_check
      _
    $region19: #{tpu_custom_call.1} parent=1 // pred_check_branch
      %53 = sbr.rel (0) target = $region21
    $region20: #{tpu_custom_call.1} parent=1 // pred_region
      _
    $region21: #{tpu_custom_call.1} parent=1 // pred_fallthru
      _
    // Predicated region
    $region22: #{tpu_custom_call.1} parent=1 // pred_check
      _
    $region23: #{tpu_custom_call.1} parent=1 // pred_check_branch
      %55 = sbr.rel (0) target = $region25
    $region24: #{tpu_custom_call.1} parent=1 // pred_region
      _
    $region25: #{tpu_custom_call.1} parent=1 // pred_fallthru
      _
    // Predicated region
    $region26: #{tpu_custom_call.1} parent=1 // pred_check
      _
    $region27: #{tpu_custom_call.1} parent=1 // pred_check_branch
      %57 = sbr.rel (0) target = $region29
    $region28: #{tpu_custom_call.1} parent=1 // pred_region
      %58 = dma.done [#allocation3], 1024
    $region29: #{tpu_custom_call.1} parent=1 // pred_fallthru
      _
    // Predicated region
    $region30: #{tpu_custom_call.1} parent=1 // pred_check
      _
    $region31: #{tpu_custom_call.1} parent=1 // pred_check_branch
      %60 = sbr.rel (0) target = $region33
    $region32: #{tpu_custom_call.1} parent=1 // pred_region
      %61 = dma.done [#allocation6], 8192
    $region33: #{tpu_custom_call.1} parent=1 // pred_fallthru
      _
    // Predicated region
    $region34: #{tpu_custom_call.1} parent=1 // pred_check
      _
    $region35: #{tpu_custom_call.1} parent=1 // pred_check_branch
      %63 = sbr.rel (0) target = $region37
    $region36: #{tpu_custom_call.1} parent=1 // pred_region
      %64 = dma.done [#allocation6], 256
    $region37: #{tpu_custom_call.1} parent=1 // pred_fallthru
      _
    %v65 = vld [vmem:[#allocation2] sm:$0xff]
    %v66 = vld [vmem:[#allocation2 + $0x8] sm:$0xff]
    %v67 = vld [vmem:[#allocation2 + $0x10] sm:$0xff]
    %v68 = vld [vmem:[#allocation2 + $0x18] sm:$0xff]
    %v69 = vld [vmem:[#allocation2 + $0x20] sm:$0xff]
    %v70 = vld [vmem:[#allocation2 + $0x28] sm:$0xff]
    %v71 = vld [vmem:[#allocation2 + $0x30] sm:$0xff]
    %v72 = vld [vmem:[#allocation2 + $0x38] sm:$0xff]
    %v73 = vld [vmem:[#allocation5] sm:$0xff]
    %v74 = vld [vmem:[#allocation5 + $0x8] sm:$0xff]
    %v75 = vld [vmem:[#allocation5 + $0x10] sm:$0xff]
    %v76 = vld [vmem:[#allocation5 + $0x18] sm:$0xff]
    %v77 = vld [vmem:[#allocation5 + $0x20] sm:$0xff]
    %v78 = vld [vmem:[#allocation5 + $0x28] sm:$0xff]
    %v79 = vld [vmem:[#allocation5 + $0x30] sm:$0xff]
    %v80 = vld [vmem:[#allocation5 + $0x38] sm:$0xff]
    %v81 = vld [vmem:[#allocation5 + $0x40] sm:$0xff]
    %v82 = vld [vmem:[#allocation5 + $0x48] sm:$0xff]
    %v83 = vld [vmem:[#allocation5 + $0x50] sm:$0xff]
    %v84 = vld [vmem:[#allocation5 + $0x58] sm:$0xff]
    %v85 = vld [vmem:[#allocation5 + $0x60] sm:$0xff]
    %v86 = vld [vmem:[#allocation5 + $0x68] sm:$0xff]
    %v87 = vld [vmem:[#allocation5 + $0x70] sm:$0xff]
    %v88 = vld [vmem:[#allocation5 + $0x78] sm:$0xff]
    %v89 = vld [vmem:[#allocation5 + $0x80] sm:$0xff]
    %v90 = vld [vmem:[#allocation5 + $0x88] sm:$0xff]
    %v91 = vld [vmem:[#allocation5 + $0x90] sm:$0xff]
    %v92 = vld [vmem:[#allocation5 + $0x98] sm:$0xff]
    %v93 = vld [vmem:[#allocation5 + $0xa0] sm:$0xff]
    %v94 = vld [vmem:[#allocation5 + $0xa8] sm:$0xff]
    %v95 = vld [vmem:[#allocation5 + $0xb0] sm:$0xff]
    %v96 = vld [vmem:[#allocation5 + $0xb8] sm:$0xff]
    %v97 = vld [vmem:[#allocation5 + $0xc0] sm:$0xff]
    %v98 = vld [vmem:[#allocation5 + $0xc8] sm:$0xff]
    %v99 = vld [vmem:[#allocation5 + $0xd0] sm:$0xff]
    %v100 = vld [vmem:[#allocation5 + $0xd8] sm:$0xff]
    %v101 = vld [vmem:[#allocation5 + $0xe0] sm:$0xff]
    %v102 = vld [vmem:[#allocation5 + $0xe8] sm:$0xff]
    %v103 = vld [vmem:[#allocation5 + $0xf0] sm:$0xff]
    %v104 = vld [vmem:[#allocation5 + $0xf8] sm:$0xff]
    %v105 = vld [vmem:[#allocation5 + $0x100] sm:$0xff]
    %v106 = vld [vmem:[#allocation5 + $0x108] sm:$0xff]
    %v107 = vld [vmem:[#allocation5 + $0x110] sm:$0xff]
    %v108 = vld [vmem:[#allocation5 + $0x118] sm:$0xff]
    %v109 = vld [vmem:[#allocation5 + $0x120] sm:$0xff]
    %v110 = vld [vmem:[#allocation5 + $0x128] sm:$0xff]
    %v111 = vld [vmem:[#allocation5 + $0x130] sm:$0xff]
    %v112 = vld [vmem:[#allocation5 + $0x138] sm:$0xff]
    %v113 = vld [vmem:[#allocation5 + $0x140] sm:$0xff]
    %v114 = vld [vmem:[#allocation5 + $0x148] sm:$0xff]
    %v115 = vld [vmem:[#allocation5 + $0x150] sm:$0xff]
    %v116 = vld [vmem:[#allocation5 + $0x158] sm:$0xff]
    %v117 = vld [vmem:[#allocation5 + $0x160] sm:$0xff]
    %v118 = vld [vmem:[#allocation5 + $0x168] sm:$0xff]
    %v119 = vld [vmem:[#allocation5 + $0x170] sm:$0xff]
    %v120 = vld [vmem:[#allocation5 + $0x178] sm:$0xff]
    %v121 = vld [vmem:[#allocation5 + $0x180] sm:$0xff]
    %v122 = vld [vmem:[#allocation5 + $0x188] sm:$0xff]
    %v123 = vld [vmem:[#allocation5 + $0x190] sm:$0xff]
    %v124 = vld [vmem:[#allocation5 + $0x198] sm:$0xff]
    %v125 = vld [vmem:[#allocation5 + $0x1a0] sm:$0xff]
    %v126 = vld [vmem:[#allocation5 + $0x1a8] sm:$0xff]
    %v127 = vld [vmem:[#allocation5 + $0x1b0] sm:$0xff]
    %v128 = vld [vmem:[#allocation5 + $0x1b8] sm:$0xff]
    %v129 = vld [vmem:[#allocation5 + $0x1c0] sm:$0xff]
    %v130 = vld [vmem:[#allocation5 + $0x1c8] sm:$0xff]
    %v131 = vld [vmem:[#allocation5 + $0x1d0] sm:$0xff]
    %v132 = vld [vmem:[#allocation5 + $0x1d8] sm:$0xff]
    %v133 = vld [vmem:[#allocation5 + $0x1e0] sm:$0xff]
    %v134 = vld [vmem:[#allocation5 + $0x1e8] sm:$0xff]
    %v135 = vld [vmem:[#allocation5 + $0x1f0] sm:$0xff]
    %v136 = vld [vmem:[#allocation5 + $0x1f8] sm:$0xff]
    %v137 = vld [vmem:[%s2] sm:$0x1]
    %v139 = vlaneseq
    %v140 = vshrl.u32 %v139, 7
    %v141 = vsub.s32 0, %v140
    %v142 = vrot.slane %v137, %v141
    %144 = vmatprep.subr.mxu0 0.0
    %145 = vmatpush1.msra.mxu0 %v73
    %146 = vmatprep.subr.mxu0 0.0
    %147 = vmatpush1.msra.mxu0 %v74
    %148 = vmatprep.subr.mxu0 0.0
    %149 = vmatpush1.msra.mxu0 %v75
    %150 = vmatprep.subr.mxu0 0.0
    %151 = vmatpush1.msra.mxu0 %v76
    %152 = vmatprep.subr.mxu0 0.0
    %153 = vmatpush1.msra.mxu0 %v77
    %154 = vmatprep.subr.mxu0 0.0
    %155 = vmatpush1.msra.mxu0 %v78
    %156 = vmatprep.subr.mxu0 0.0
    %157 = vmatpush1.msra.mxu0 %v79
    %158 = vmatprep.subr.mxu0 0.0
    %159 = vmatpush1.msra.mxu0 %v80
    %160 = vmatprep.subr.mxu0 0.0
    %161 = vmatpush1.msra.mxu0 %v81
    %162 = vmatprep.subr.mxu0 0.0
    %163 = vmatpush1.msra.mxu0 %v82
    %164 = vmatprep.subr.mxu0 0.0
    %165 = vmatpush1.msra.mxu0 %v83
    %166 = vmatprep.subr.mxu0 0.0
    %167 = vmatpush1.msra.mxu0 %v84
    %168 = vmatprep.subr.mxu0 0.0
    %169 = vmatpush1.msra.mxu0 %v85
    %170 = vmatprep.subr.mxu0 0.0
    %171 = vmatpush1.msra.mxu0 %v86
    %172 = vmatprep.subr.mxu0 0.0
    %173 = vmatpush1.msra.mxu0 %v87
    %174 = vmatprep.subr.mxu0 0.0
    %175 = vmatpush1.msra.mxu0 %v88
    %176 = vmatprep.subr.mxu0 0.0
    %177 = vmatpush1.msra.mxu0 %v89
    %178 = vmatprep.subr.mxu0 0.0
    %179 = vmatpush1.msra.mxu0 %v90
    %180 = vmatprep.subr.mxu0 0.0
    %181 = vmatpush1.msra.mxu0 %v91
    %182 = vmatprep.subr.mxu0 0.0
    %183 = vmatpush1.msra.mxu0 %v92
    %184 = vmatprep.subr.mxu0 0.0
    %185 = vmatpush1.msra.mxu0 %v93
    %186 = vmatprep.subr.mxu0 0.0
    %187 = vmatpush1.msra.mxu0 %v94
    %188 = vmatprep.subr.mxu0 0.0
    %189 = vmatpush1.msra.mxu0 %v95
    %190 = vmatprep.subr.mxu0 0.0
    %191 = vmatpush1.msra.mxu0 %v96
    %192 = vmatprep.subr.mxu0 0.0
    %193 = vmatpush1.msra.mxu0 %v97
    %194 = vmatprep.subr.mxu0 0.0
    %195 = vmatpush1.msra.mxu0 %v98
    %196 = vmatprep.subr.mxu0 0.0
    %197 = vmatpush1.msra.mxu0 %v99
    %198 = vmatprep.subr.mxu0 0.0
    %199 = vmatpush1.msra.mxu0 %v100
    %200 = vmatprep.subr.mxu0 0.0
    %201 = vmatpush1.msra.mxu0 %v101
    %202 = vmatprep.subr.mxu0 0.0
    %203 = vmatpush1.msra.mxu0 %v102
    %204 = vmatprep.subr.mxu0 0.0
    %205 = vmatpush1.msra.mxu0 %v103
    %206 = vmatprep.subr.mxu0 0.0
    %207 = vmatpush1.msra.mxu0 %v104
    %208 = vmatprep.mubr.f32.mxu0 %v66
    %209 = vmatmul.mubr.f32.gmra.mrb[0].mxu0 %v65
    %v210 = vpop.f32.mrb[0].mxu0
    %v211 = vadd.f32 %v142, %v210
    %v212 = vpop.f32.mrb[0].mxu0
    %213 = vmatprep.mubr.f32.mxu0 %v70
    %214 = vmatmul.mubr.f32.gmra.mrb[0].mxu0 %v69
    %v215 = vpop.f32.mrb[0].mxu0
    %v216 = vadd.f32 %v142, %v215
    %v217 = vpop.f32.mrb[0].mxu0
    %218 = vdwg.mxu0
    %219 = vmatprep.subr.mxu0 0.0
    %220 = vmatpush1.msra.mxu0 %v105
    %221 = vmatprep.subr.mxu0 0.0
    %222 = vmatpush1.msra.mxu0 %v106
    %223 = vmatprep.subr.mxu0 0.0
    %224 = vmatpush1.msra.mxu0 %v107
    %225 = vmatprep.subr.mxu0 0.0
    %226 = vmatpush1.msra.mxu0 %v108
    %227 = vmatprep.subr.mxu0 0.0
    %228 = vmatpush1.msra.mxu0 %v109
    %229 = vmatprep.subr.mxu0 0.0
    %230 = vmatpush1.msra.mxu0 %v110
    %231 = vmatprep.subr.mxu0 0.0
    %232 = vmatpush1.msra.mxu0 %v111
    %233 = vmatprep.subr.mxu0 0.0
    %234 = vmatpush1.msra.mxu0 %v112
    %235 = vmatprep.subr.mxu0 0.0
    %236 = vmatpush1.msra.mxu0 %v113
    %237 = vmatprep.subr.mxu0 0.0
    %238 = vmatpush1.msra.mxu0 %v114
    %239 = vmatprep.subr.mxu0 0.0
    %240 = vmatpush1.msra.mxu0 %v115
    %241 = vmatprep.subr.mxu0 0.0
    %242 = vmatpush1.msra.mxu0 %v116
    %243 = vmatprep.subr.mxu0 0.0
    %244 = vmatpush1.msra.mxu0 %v117
    %245 = vmatprep.subr.mxu0 0.0
    %246 = vmatpush1.msra.mxu0 %v118
    %247 = vmatprep.subr.mxu0 0.0
    %248 = vmatpush1.msra.mxu0 %v119
    %249 = vmatprep.subr.mxu0 0.0
    %250 = vmatpush1.msra.mxu0 %v120
    %251 = vmatprep.subr.mxu0 0.0
    %252 = vmatpush1.msra.mxu0 %v121
    %253 = vmatprep.subr.mxu0 0.0
    %254 = vmatpush1.msra.mxu0 %v122
    %255 = vmatprep.subr.mxu0 0.0
    %256 = vmatpush1.msra.mxu0 %v123
    %257 = vmatprep.subr.mxu0 0.0
    %258 = vmatpush1.msra.mxu0 %v124
    %259 = vmatprep.subr.mxu0 0.0
    %260 = vmatpush1.msra.mxu0 %v125
    %261 = vmatprep.subr.mxu0 0.0
    %262 = vmatpush1.msra.mxu0 %v126
    %263 = vmatprep.subr.mxu0 0.0
    %264 = vmatpush1.msra.mxu0 %v127
    %265 = vmatprep.subr.mxu0 0.0
    %266 = vmatpush1.msra.mxu0 %v128
    %267 = vmatprep.subr.mxu0 0.0
    %268 = vmatpush1.msra.mxu0 %v129
    %269 = vmatprep.subr.mxu0 0.0
    %270 = vmatpush1.msra.mxu0 %v130
    %271 = vmatprep.subr.mxu0 0.0
    %272 = vmatpush1.msra.mxu0 %v131
    %273 = vmatprep.subr.mxu0 0.0
    %274 = vmatpush1.msra.mxu0 %v132
    %275 = vmatprep.subr.mxu0 0.0
    %276 = vmatpush1.msra.mxu0 %v133
    %277 = vmatprep.subr.mxu0 0.0
    %278 = vmatpush1.msra.mxu0 %v134
    %279 = vmatprep.subr.mxu0 0.0
    %280 = vmatpush1.msra.mxu0 %v135
    %281 = vmatprep.subr.mxu0 0.0
    %282 = vmatpush1.msra.mxu0 %v136
    %283 = vmatprep.mubr.f32.mxu0 %v68
    %284 = vmatmul.mubr.f32.gmra.mrb[0].mxu0 %v67
    %v285 = vpop.f32.mrb[0].mxu0
    %v286 = vadd.f32 %v211, %v285
    %v287 = vpop.f32.mrb[0].mxu0
    %288 = vmatprep.mubr.f32.mxu0 %v72
    %289 = vmatmul.mubr.f32.gmra.mrb[0].mxu0 %v71
    %v290 = vpop.f32.mrb[0].mxu0
    %v291 = vadd.f32 %v216, %v290
    %v292 = vpop.f32.mrb[0].mxu0
    %293 = vdwg.mxu0
    %v294 = vld [vmem:[#allocation7] sm:$0xff]
    %v295 = vld [vmem:[#allocation7 + $0x8] sm:$0xff]
    %v296 = vadd.f32 %v286, %v294
    %v297 = vadd.f32 %v291, %v295
    %298 = vadd.xlane.f32.xlu0 %v296
    %v299 = vpop.xlane.xlu0 %298
    %300 = vadd.xlane.f32.xlu0 %v297
    %v301 = vpop.xlane.xlu0 %300
    %v302 = vrcp.pop 128.0
    %v303 = vmul.f32 %v299, %v302
    %v304 = vmul.f32 %v301, %v302
    %v305 = vsub.f32 %v296, %v303
    %v306 = vsub.f32 %v297, %v304
    %v307 = vmul.f32 %v305, %v305
    %v308 = vmul.f32 %v306, %v306
    %309 = vadd.xlane.f32.xlu0 %v307
    %v310 = vpop.xlane.xlu0 %309
    %311 = vadd.xlane.f32.xlu0 %v308
    %v312 = vpop.xlane.xlu0 %311
    %v313 = vmul.f32 %v310, %v302
    %v314 = vmul.f32 %v312, %v302
    %v315 = vadd.f32 %v313, 1e-07
    %v316 = vadd.f32 %v314, 1e-07
    %v317 = vrsqrt.pop %v315
    %v318 = vrsqrt.pop %v316
    %v319 = vmul.f32 %v305, %v317
    %v320 = vmul.f32 %v306, %v318
    %v321 = vld [vmem:[%s4] sm:$0x1]
    %v323 = vlaneseq
    %v324 = vshrl.u32 %v323, 7
    %v325 = vsub.s32 0, %v324
    %v326 = vrot.slane %v321, %v325
    %v328 = vmul.f32 %v319, %v326
    %v329 = vmul.f32 %v320, %v326
    %v330 = vld [vmem:[%s5] sm:$0x1]
    %v332 = vlaneseq
    %v333 = vshrl.u32 %v332, 7
    %v334 = vsub.s32 0, %v333
    %v335 = vrot.slane %v330, %v334
    %v337 = vadd.f32 %v328, %v335
    %v338 = vadd.f32 %v329, %v335
    %339 = vst [vmem:[#allocation8] sm:$0xff] %v337
    %340 = vst [vmem:[#allocation8 + $0x8] sm:$0xff] %v338
    // Predicated region
    $region38: #{tpu_custom_call.1} parent=1 // pred_check
      _
    $region39: #{tpu_custom_call.1} parent=1 // pred_check_branch
      %342 = sbr.rel (0) target = $region41
    $region40: #{tpu_custom_call.1} parent=1 // pred_region
      %s344 = ssub.s32 256, 256
      %345 = vsyncadd [#allocation4], %s344
      %s346 = sshll.u32 [#allocation8], 4
      %s347 = int_to_ptr.vmem [resolvable:$true] %s346
      %352 = dma.vmem_to_hbm [thread:$0]  %s347, 256, %s6, [#allocation4], 128, 128, 8
    $region41: #{tpu_custom_call.1} parent=1 // pred_fallthru
      _
    // Predicated region
    $region42: #{tpu_custom_call.1} parent=1 // pred_check
      _
    $region43: #{tpu_custom_call.1} parent=1 // pred_check_branch
      %354 = sbr.rel (0) target = $region45
    $region44: #{tpu_custom_call.1} parent=1 // pred_region
      %355 = dma.done [#allocation4], 256
    $region45: #{tpu_custom_call.1} parent=1 // pred_fallthru
      _
    %356 = vsyncpa [#allocation3], 1
    %357 = vsyncpa [#allocation6], 1
    %358 = vsyncpa [#allocation4], 1

</llo_original>
